<compile_context>
chip_gen: v5e
topology: v5e:2x2
jax: 0.10.0
libtpu: 0.0.40
codegen_flags: <defaults>
</compile_context>

<pallas_src>
import functools

import jax
import jax.numpy as jnp
from jax.experimental import pallas as pl
from jax.experimental.pallas import tpu as pltpu


def _round_up(x: int, m: int) -> int:
    return ((x + m - 1) // m) * m


def _frame_kernel(pos_ref, val_ref, out_ref, *, compute_dtype):
    """One (frame, xy-tile, tw-tile) grid step.

    pos_ref : (1, TW_TILE, 1)    int32   pixel id of each event (-1 = padding)
    val_ref : (1, 2*S, TW_TILE)  float32 fused (channel, sample) values
    out_ref : (1, 2*S, XY_TILE)  float32 resident across the TW axis (accumulator)
    """
    j = pl.program_id(1)            # xy-tile index
    k = pl.program_id(2)            # tw-tile index (reduction axis, innermost)

    @pl.when(k == 0)
    def _():
        out_ref[...] = jnp.zeros_like(out_ref)

    pos = pos_ref[0]                                   # [TW_TILE, 1] int32
    tw_tile = pos.shape[0]
    xy_tile = out_ref.shape[-1]

    # Global pixel ids covered by this xy tile.
    pix = jax.lax.broadcasted_iota(jnp.int32, (tw_tile, xy_tile), 1) + j * xy_tile
    # One-hot scatter matrix. The compare stays on the int32 VALU path; only the
    # final cast goes to compute_dtype (bf16 halves the dominant temporary).
    onehot = (pos == pix).astype(compute_dtype)        # [TW_TILE, XY_TILE]
    vals = val_ref[0].astype(compute_dtype)            # [2S, TW_TILE]

    # Single fused matmul for both channels and all samples, f32 accumulation
    # directly into the resident output block.
    out_ref[0, :, :] += jnp.dot(vals, onehot, preferred_element_type=jnp.float32)


def _integrate_frames_pallas(pos, vals, frame_size, *,
                             compute_dtype=jnp.float32,
                             tw_tile_max=512, xy_tile_max=2048,
                             vmem_limit_bytes=32 * 1024 * 1024):
    """pos: [FN, TW] int32 ; vals: [FN, 2*S, TW] f32 -> [FN, 2*S, F*F] f32."""
    fn, tw = pos.shape
    _, two_s, _ = vals.shape
    xy = frame_size * frame_size

    # ---- event (TW) tiling: bounds the [TW_TILE, XY_TILE] one-hot tile. ----
    # tw_tile_max is a multiple of both 8 (sublane) and 128 (lane) so the pos
    # and vals BlockSpecs stay legal whether or not we tile.
    tw_pad = _round_up(tw, 8)
    if tw_pad <= tw_tile_max:
        tw_tile = tw_pad
    else:
        tw_tile = tw_tile_max
        tw_pad = _round_up(tw, tw_tile)
    if tw_pad != tw:
        # Padded events: pos = -1 matches no pixel and their values are zero.
        pos = jnp.pad(pos, ((0, 0), (0, tw_pad - tw)), constant_values=-1)
        vals = jnp.pad(vals, ((0, 0), (0, 0), (0, tw_pad - tw)))
    n_tw = tw_pad // tw_tile

    # ---- pixel (XY) tiling: keeps output stores lane-dense (mult. of 128). ----
    if xy <= xy_tile_max:
        xy_tile = xy
        xy_pad = xy
    else:
        xy_tile = xy_tile_max                 # multiple of 128
        xy_pad = _round_up(xy, xy_tile)
    n_xy = xy_pad // xy_tile

    pos = pos[..., None]                      # [FN, TW_pad, 1] (column per tile)

    grid_spec = pltpu.PrefetchScalarGridSpec(
        num_scalar_prefetch=0,
        grid=(fn, n_xy, n_tw),                # TW (reduction) axis last
        in_specs=[
            pl.BlockSpec((1, tw_tile, 1), lambda f, j, k: (f, k, 0)),
            pl.BlockSpec((1, two_s, tw_tile), lambda f, j, k: (f, 0, k)),
        ],
        out_specs=pl.BlockSpec((1, two_s, xy_tile), lambda f, j, k: (f, 0, j)),
    )
    out = pl.pallas_call(
        functools.partial(_frame_kernel, compute_dtype=compute_dtype),
        out_shape=jax.ShapeDtypeStruct((fn, two_s, xy_pad), jnp.float32),
        grid_spec=grid_spec,
        compiler_params=pltpu.CompilerParams(
            dimension_semantics=("parallel", "parallel", "arbitrary"),
            vmem_limit_bytes=vmem_limit_bytes,
        ),
    )(pos, vals)
    if xy_pad != xy:
        out = out[..., :xy]
    return out


class FrameGenerator:
    """JAX/Pallas port of the PyTorch FrameGenerator (no learnable params)."""

    def __init__(self, split_by: str, frame_number: int, frame_size: int,
                 compute_dtype=jnp.float32):
        assert split_by in ("time", "number")
        self.split_by = split_by
        self.frame_number = frame_number
        self.frame_size = frame_size
        # jnp.bfloat16 -> fast path (onehot + values in bf16, f32 accumulation);
        # jnp.float32 (default) preserves the module's exact f32 numerics.
        self.compute_dtype = compute_dtype

    def __call__(self, event_values, event_indices, use_soft: bool):
        """
        event_values : soft -> [S, E, 2] ; hard -> [S, E]
        event_indices: [S, 3, E] (rows: t, x, y); only sample 0 is used,
                       exactly as in the PyTorch reference.
        returns      : [frame_number, S, 2, Y, X] float32
        """
        if self.split_by == "time":
            raise NotImplementedError()   # matches PyTorch behavior
        fnum, fsz = self.frame_number, self.frame_size

        if use_soft:
            # channels = values[..., 0], values[..., -1]
            chan_vals = jnp.stack(
                [event_values[..., 0], event_values[..., -1]], axis=0)
        else:
            # channels = (relu(-v), relu(v))
            chan_vals = jnp.stack(
                [jnp.maximum(-event_values, 0.0),
                 jnp.maximum(event_values, 0.0)], axis=0)
        chan_vals = chan_vals.astype(jnp.float32)        # [2, S, E]
        s_num, e_num = chan_vals.shape[1], chan_vals.shape[2]

        tw = e_num // fnum
        e_used = tw * fnum                               # trailing events dropped (PyTorch //)
        chan_vals = chan_vals[:, :, :e_used]

        idx0 = event_indices[0].astype(jnp.int32)        # [3, E] (t, x, y) of sample 0
        pos = idx0[1, :e_used] * fsz + idx0[2, :e_used]  # flattened x-major pixel id
        pos = pos.reshape(fnum, tw)                      # [FN, TW]

        # Fuse (channel, sample) into one matmul M-dim: vals [FN, 2*S, TW].
        vals = chan_vals.reshape(2, s_num, fnum, tw)     # [2, S, FN, TW]
        vals = jnp.transpose(vals, (2, 0, 1, 3)).reshape(fnum, 2 * s_num, tw)

        out = _integrate_frames_pallas(pos, vals, fsz,
                                       compute_dtype=self.compute_dtype)
        out = out.reshape(fnum, 2, s_num, fsz, fsz)      # [f, c, s, x, y]
        # PyTorch: permute(-1,0,1,3,2) then transpose(0,1) -> [f, s, c, y, x]
        out = jnp.transpose(out, (0, 2, 1, 4, 3))
        return out


# ---------------------------------------------------------------------------
# Pure-JAX reference (mirrors the torch.sparse scatter/coalesce semantics).
# ---------------------------------------------------------------------------
def _reference_forward(event_values, event_indices, use_soft, frame_number,
                       frame_size):
    idx = event_indices[0]
    x, y = idx[1], idx[2]
    e_num = idx.shape[1]
    tw = e_num // frame_number
    if use_soft:
        cv = jnp.stack([event_values[..., 0], event_values[..., -1]], axis=0)
    else:
        cv = jnp.stack([jnp.maximum(-event_values, 0.0),
                        jnp.maximum(event_values, 0.0)], axis=0)
    cv = cv.astype(jnp.float32)                       # [2, S, E]
    s_num = cv.shape[1]
    out = jnp.zeros((frame_number, s_num, 2, frame_size, frame_size),
                    jnp.float32)
    for f in range(frame_number):
        lo, hi = f * tw, (f + 1) * tw
        for c in range(2):
            frame = jnp.zeros((frame_size, frame_size, s_num), jnp.float32)
            frame = frame.at[x[lo:hi], y[lo:hi], :].add(cv[c, :, lo:hi].T)
            # out[f, s, c, y, x'] = frame[x', y, s]
            out = out.at[f, :, c].set(jnp.transpose(frame, (2, 1, 0)))
    return out


if __name__ == "__main__":
    key = jax.random.PRNGKey(0)
    keys = jax.random.split(key, 10)

    # -------- small case: grid collapses to one (XY, TW) tile per frame -----
    sample_num = 2
    num_events = 512
    frame_number = 4
    frame_size = 16

    t_idx = jnp.sort(jax.random.randint(keys[0], (num_events,), 0, 1000))
    x_idx = jax.random.randint(keys[1], (num_events,), 0, frame_size)
    y_idx = jax.random.randint(keys[2], (num_events,), 0, frame_size)
    idx0 = jnp.stack([t_idx, x_idx, y_idx], axis=0).astype(jnp.int32)  # [3, E]
    event_indices = jnp.broadcast_to(idx0[None], (sample_num, 3, num_events))

    soft_values = jax.random.uniform(keys[3], (sample_num, num_events, 2),
                                     dtype=jnp.float32)
    hard_values = jax.random.uniform(keys[4], (sample_num, num_events),
                                     minval=-1.0, maxval=1.0, dtype=jnp.float32)

    gen = FrameGenerator("number", frame_number, frame_size)
    out_soft = jax.block_until_ready(gen(soft_values, event_indices, True))
    out_hard = jax.block_until_ready(gen(hard_values, event_indices, False))

    ref_soft = _reference_forward(soft_values, event_indices, True,
                                  frame_number, frame_size)
    ref_hard = _reference_forward(hard_values, event_indices, False,
                                  frame_number, frame_size)

    assert out_soft.shape == (frame_number, sample_num, 2, frame_size, frame_size)
    assert out_hard.shape == (frame_number, sample_num, 2, frame_size, frame_size)
    assert jnp.allclose(out_soft, ref_soft, atol=1e-4, rtol=1e-4)
    assert jnp.allclose(out_hard, ref_hard, atol=1e-4, rtol=1e-4)

    # -------- bf16 fast path (onehot + values bf16, f32 accumulation) -------
    gen_bf16 = FrameGenerator("number", frame_number, frame_size,
                              compute_dtype=jnp.bfloat16)
    out_soft_bf16 = jax.block_until_ready(gen_bf16(soft_values, event_indices, True))
    assert jnp.allclose(out_soft_bf16, ref_soft, atol=5e-2, rtol=5e-2)

    # -------- larger case: exercises XY tiling and TW tiling + padding ------
    sample_num2 = 2
    num_events2 = 2176           # 2 frames x 1088 events -> padded to 3 TW tiles
    frame_number2 = 2
    frame_size2 = 64             # XY = 4096 -> 2 xy tiles of 2048

    t2 = jnp.sort(jax.random.randint(keys[5], (num_events2,), 0, 10000))
    x2 = jax.random.randint(keys[6], (num_events2,), 0, frame_size2)
    y2 = jax.random.randint(keys[7], (num_events2,), 0, frame_size2)
    idx2 = jnp.stack([t2, x2, y2], axis=0).astype(jnp.int32)
    event_indices2 = jnp.broadcast_to(idx2[None], (sample_num2, 3, num_events2))
    soft_values2 = jax.random.uniform(keys[8], (sample_num2, num_events2, 2),
                                      dtype=jnp.float32)

    gen2 = FrameGenerator("number", frame_number2, frame_size2)
    out2 = jax.block_until_ready(gen2(soft_values2, event_indices2, True))
    ref2 = _reference_forward(soft_values2, event_indices2, True,
                              frame_number2, frame_size2)
    assert out2.shape == (frame_number2, sample_num2, 2, frame_size2, frame_size2)
    assert jnp.allclose(out2, ref2, atol=1e-4, rtol=1e-4)

    print("KERNEL_OK")
</pallas_src>

<mosaic_0001>
module attributes {stable_mosaic.version = 11 : i64} {
  func.func @_frame_kernel(%arg0: i32, %arg1: i32, %arg2: i32, %arg3: memref<1x128x1xi32, #tpu.memory_space<vmem>>, %arg4: memref<1x4x128xf32, #tpu.memory_space<vmem>>, %arg5: memref<1x4x256xf32, #tpu.memory_space<vmem>>) attributes {dimension_semantics = [#tpu.dimension_semantics<parallel>, #tpu.dimension_semantics<parallel>, #tpu.dimension_semantics<arbitrary>], iteration_bounds = array<i64: 4, 1, 1>, scalar_prefetch = 0 : i64, scratch_operands = 0 : i64, tpu.core_type = #tpu.core_type<tc>, window_params = [{transform_indices = @transform_0, window_bounds = array<i64: 1, 128, 1>}, {transform_indices = @transform_1, window_bounds = array<i64: 1, 4, 128>}, {transform_indices = @transform_2, window_bounds = array<i64: 1, 4, 256>}]} {
    %c0_i32 = arith.constant 0 : i32
    %0 = arith.cmpi eq, %arg2, %c0_i32 : i32
    %1 = arith.extui %0 : i1 to i32
    %c0_i32_0 = arith.constant 0 : i32
    %2 = arith.cmpi ne, %1, %c0_i32_0 : i32
    scf.if %2 {
      %cst_12 = arith.constant 0.000000e+00 : f32
      %22 = vector.broadcast %cst_12 : f32 to vector<1x4x256xf32>
      %c0_13 = arith.constant 0 : index
      %c0_14 = arith.constant 0 : index
      %c0_15 = arith.constant 0 : index
      %23 = vector.load %arg5[%c0_13, %c0_14, %c0_15] : memref<1x4x256xf32, #tpu.memory_space<vmem>>, vector<1x4x256xf32>
      tpu.vector_store %arg5[%c0_13, %c0_14, %c0_15], %22 {strides = array<i32>} : memref<1x4x256xf32, #tpu.memory_space<vmem>>, vector<1x4x256xf32>,
    } else {
    }
    %c0 = arith.constant 0 : index
    %c0_1 = arith.constant 0 : index
    %c0_2 = arith.constant 0 : index
    %3 = vector.load %arg3[%c0, %c0_1, %c0_2] : memref<1x128x1xi32, #tpu.memory_space<vmem>>, vector<1x128x1xi32>
    %4 = vector.shape_cast %3 : vector<1x128x1xi32> to vector<128x1xi32>
    %5 = tpu.iota {dimensions = array<i32: 1>} : vector<128x256xi32>
    %c256_i32 = arith.constant 256 : i32
    %6 = arith.muli %arg1, %c256_i32 : i32
    %7 = vector.broadcast %6 : i32 to vector<128x256xi32>
    %8 = arith.addi %5, %7 : vector<128x256xi32>
    %9 = vector.broadcast %4 : vector<128x1xi32> to vector<128x256xi32>
    %10 = arith.cmpi eq, %9, %8 : vector<128x256xi32>
    %11 = arith.extui %10 : vector<128x256xi1> to vector<128x256xi32>
    %12 = arith.sitofp %11 : vector<128x256xi32> to vector<128x256xf32>
    %c0_3 = arith.constant 0 : index
    %c0_4 = arith.constant 0 : index
    %c0_5 = arith.constant 0 : index
    %13 = vector.load %arg4[%c0_3, %c0_4, %c0_5] : memref<1x4x128xf32, #tpu.memory_space<vmem>>, vector<1x4x128xf32>
    %14 = vector.shape_cast %13 : vector<1x4x128xf32> to vector<4x128xf32>
    %c0_6 = arith.constant 0 : index
    %c0_7 = arith.constant 0 : index
    %c0_8 = arith.constant 0 : index
    %15 = vector.load %arg5[%c0_6, %c0_7, %c0_8] : memref<1x4x256xf32, #tpu.memory_space<vmem>>, vector<1x4x256xf32>
    %16 = vector.shape_cast %15 : vector<1x4x256xf32> to vector<4x256xf32>
    %cst = arith.constant dense<0.000000e+00> : vector<4x256xf32>
    %17 = tpu.matmul %14, %12, %cst {dimension_numbers = #tpu.dot_dimension_numbers<[1], [0], [0], [1], [0, 0, 1, 1], [], []>} : vector<4x128xf32>, vector<128x256xf32>, vector<4x256xf32> -> vector<4x256xf32>
    %18 = arith.addf %16, %17 : vector<4x256xf32>
    %c0_9 = arith.constant 0 : index
    %c0_10 = arith.constant 0 : index
    %c0_11 = arith.constant 0 : index
    %19 = vector.load %arg5[%c0_9, %c0_10, %c0_11] : memref<1x4x256xf32, #tpu.memory_space<vmem>>, vector<1x4x256xf32>
    %20 = vector.shape_cast %19 : vector<1x4x256xf32> to vector<4x256xf32>
    %21 = vector.shape_cast %18 : vector<4x256xf32> to vector<1x4x256xf32>
    tpu.vector_store %arg5[%c0_9, %c0_10, %c0_11], %21 {strides = array<i32>} : memref<1x4x256xf32, #tpu.memory_space<vmem>>, vector<1x4x256xf32>,
    return
  }
  func.func @transform_0(%arg0: i32, %arg1: i32, %arg2: i32) -> (i32, i32, i32) {
    %c0_i32 = arith.constant 0 : i32
    %c0_i32_0 = arith.constant 0 : i32
    return %arg0, %arg2, %c0_i32 : i32, i32, i32
  }
  func.func @transform_1(%arg0: i32, %arg1: i32, %arg2: i32) -> (i32, i32, i32) {
    %c0_i32 = arith.constant 0 : i32
    %c0_i32_0 = arith.constant 0 : i32
    return %arg0, %c0_i32, %arg2 : i32, i32, i32
  }
  func.func @transform_2(%arg0: i32, %arg1: i32, %arg2: i32) -> (i32, i32, i32) {
    %c0_i32 = arith.constant 0 : i32
    %c0_i32_0 = arith.constant 0 : i32
    return %arg0, %c0_i32, %arg1 : i32, i32, i32
  }
}

</mosaic_0001>

<llo_original>
// kernel: tpu_custom_call.1
$region0: #{tpu_custom_call.1}
  #allocation0 [shape = 'u32[]', space=smem, size = 0x4, offset = 0x4, fixed_abs, tag = 'smem constant byte address 0x4 - core index']
  #allocation1 [shape = 'u32[72,128]{1,0:T(1,128)}', space=vmem, size = 0x9000, scoped, tag = 'internal scratch']
  %s0 = inlined_call_operand.vmem [shape: s32[4,128,1], index: 0, kind: input, shape index: {}]
  %s1 = inlined_call_operand.vmem [shape: f32[4,4,128], index: 1, kind: input, shape index: {}]
  %s2 = inlined_call_operand.hbm [shape: f32[4,4,256], index: 2, kind: output, shape index: {}]
  %s3 = sld [smem:[#allocation0]]
  $region45: #{tpu_custom_call.1} parent=0
    _
  %s5 = ssub.s32 1, %s3
  %s6 = scalar_select 0, %s5, %s3
  $region1: #{tpu_custom_call.1} parent=0
    #allocation2 [shape = 'u8[8192]{0}', space=vmem, size = 0x2000, scoped, tag = 'output window, operand 0']
    #allocation3 [shape = 's32[2]{0}', space=sflag, size = 0x8, scoped, tag = 'scoped memory for tpu_custom_call.1']
    %7 = vsyncpa [#allocation3], 0
    %s8 = scalar_lea.sflag [#allocation3], 1
    %9 = vsyncpa %s8, 0
    loop: start=0, step=1, limit=6
    $region2: #{tpu_custom_call.1} parent=1 // loop_pre_header
      _
    $region3: #{tpu_custom_call.1} parent=1 // loop_header
      %s11 = sphi 0, %s15
      %p12 = scmp.ge.s32.totalorder %s11, 6
      %s18 = sphi 0, %s37
      %s19 = sphi 0, %s33
      %s20 = sphi 0, %s29
      %s21 = sphi 0, %s18
      %s22 = sphi 0, %s19
      %s23 = sphi 0, %s20
      %s24 = sphi 0, %s21
      %s25 = sphi 0, %s22
      %s26 = sphi 0, %s23
      %s42 = sphi 0, %s44
      %s45 = sphi 0, %s42
      %s46 = sphi 0, %s45
      %s62 = sphi 0, %s46
      %s70 = sphi 0, %s72
      %s73 = sphi 0, %s70
      %s74 = sphi 0, %s73
      %s90 = sphi 0, %s74
      %s98 = sphi 0, %s100
      %s101 = sphi 0, %s98
      %s102 = sphi 0, %s101
      %s118 = sphi 0, %s102
    $region4: #{tpu_custom_call.1} parent=1 // loop_header_branch
      %14 = sbr.rel (%p12) target = $region8
    $region5: #{tpu_custom_call.1} parent=1 // loop_body
      %s16 = ssub.s32 %s11, 1
      %s17 = ssub.s32 %s11, 2
      %s27 = sadd.s32 1, %s20
      %p28 = scmp.ge.s32.totalorder %s27, 1
      %s29 = scalar_select %p28, 0, %s27
      %s30 = sadd.s32 1, %s19
      %s31 = scalar_select %p28, %s30, %s19
      %p32 = scmp.ge.s32.totalorder %s31, 1
      %s33 = scalar_select %p32, 0, %s31
      %s34 = sadd.s32 1, %s18
      %s35 = scalar_select %p32, %s34, %s18
      %p36 = scmp.ge.s32.totalorder %s35, 4
      %s37 = scalar_select %p36, 0, %s35
      %s38 = ssub.s32 %s18, %s37
      %s39 = ssub.s32 %s20, %s29
      %s40 = sor.u32 %s38, %s39
      %p41 = scmp.eq.s32.totalorder %s40, 0
      %s43 = sadd.s32 %s42, 1
      %s44 = scalar_select %p41, %s42, %s43
      %p47 = pneg %p41
      %p48 = scmp.eq.s32.totalorder %s11, 3
      %p49 = por %p47, %p48
      %p50 = scmp.ne.s32.totalorder %s42, %s45
      %p51 = scmp.eq.s32.totalorder %s11, 0
      %p52 = por %p50, %p51
      %p53 = scmp.ne.s32.totalorder %s42, %s45
      %p54 = scmp.eq.s32.totalorder %s16, 3
      %p55 = por %p53, %p54
      %p56 = scmp.ne.s32.totalorder %s45, %s46
      %p57 = scmp.eq.s32.totalorder %s16, 0
      %p58 = por %p56, %p57
      %p59 = scmp.ne.s32.totalorder %s45, %s46
      %p60 = scmp.eq.s32.totalorder %s17, 3
      %p61 = por %p59, %p60
      %p63 = scmp.ne.s32.totalorder %s46, %s62
      %p64 = scmp.eq.s32.totalorder %s17, 0
      %p65 = por %p63, %p64
      %s66 = ssub.s32 %s18, %s37
      %s67 = ssub.s32 %s20, %s29
      %s68 = sor.u32 %s66, %s67
      %p69 = scmp.eq.s32.totalorder %s68, 0
      %s71 = sadd.s32 %s70, 1
      %s72 = scalar_select %p69, %s70, %s71
      %p75 = pneg %p69
      %p76 = scmp.eq.s32.totalorder %s11, 3
      %p77 = por %p75, %p76
      %p78 = scmp.ne.s32.totalorder %s70, %s73
      %p79 = scmp.eq.s32.totalorder %s11, 0
      %p80 = por %p78, %p79
      %p81 = scmp.ne.s32.totalorder %s70, %s73
      %p82 = scmp.eq.s32.totalorder %s16, 3
      %p83 = por %p81, %p82
      %p84 = scmp.ne.s32.totalorder %s73, %s74
      %p85 = scmp.eq.s32.totalorder %s16, 0
      %p86 = por %p84, %p85
      %p87 = scmp.ne.s32.totalorder %s73, %s74
      %p88 = scmp.eq.s32.totalorder %s17, 3
      %p89 = por %p87, %p88
      %p91 = scmp.ne.s32.totalorder %s74, %s90
      %p92 = scmp.eq.s32.totalorder %s17, 0
      %p93 = por %p91, %p92
      %s94 = ssub.s32 %s18, %s37
      %s95 = ssub.s32 %s19, %s33
      %s96 = sor.u32 %s94, %s95
      %p97 = scmp.eq.s32.totalorder %s96, 0
      %s99 = sadd.s32 %s98, 1
      %s100 = scalar_select %p97, %s98, %s99
      %p103 = pneg %p97
      %p104 = scmp.eq.s32.totalorder %s11, 3
      %p105 = por %p103, %p104
      %p106 = scmp.ne.s32.totalorder %s98, %s101
      %p107 = scmp.eq.s32.totalorder %s11, 0
      %p108 = por %p106, %p107
      %p109 = scmp.ne.s32.totalorder %s98, %s101
      %p110 = scmp.eq.s32.totalorder %s16, 3
      %p111 = por %p109, %p110
      %p112 = scmp.ne.s32.totalorder %s101, %s102
      %p113 = scmp.eq.s32.totalorder %s16, 0
      %p114 = por %p112, %p113
      %p115 = scmp.ne.s32.totalorder %s101, %s102
      %p116 = scmp.eq.s32.totalorder %s17, 3
      %p117 = por %p115, %p116
      %p119 = scmp.ne.s32.totalorder %s102, %s118
      %p120 = scmp.eq.s32.totalorder %s17, 0
      %p121 = por %p119, %p120
      %p122 = scmp.le.s32.totalorder 1, %s11
      %p123 = scmp.lt.s32.totalorder %s11, 5
      %p124 = pnand %p122, %p123
      %p125 = pneg %p124
      // Predicated region
      $region9: #{tpu_custom_call.1} parent=5 // pred_check
        _
      $region10: #{tpu_custom_call.1} parent=5 // pred_check_branch
        %127 = sbr.rel (%p124) target = $region12
      $region11: #{tpu_custom_call.1} parent=5 // pred_region
        %s128 = ssub.s32 %s11, 1
      $region12: #{tpu_custom_call.1} parent=5 // pred_fallthru
        _
      %p129 = scmp.lt.s32.totalorder %s11, 4
      // Predicated region
      $region13: #{tpu_custom_call.1} parent=5 // pred_check
        %p130 = pneg %p129
      $region14: #{tpu_custom_call.1} parent=5 // pred_check_branch
        %132 = sbr.rel (%p130) target = $region16
      $region15: #{tpu_custom_call.1} parent=5 // pred_region
        // Predicated region
        $region17: #{tpu_custom_call.1} parent=15 // pred_check
          %p133 = pneg %p52
        $region18: #{tpu_custom_call.1} parent=15 // pred_check_branch
          %135 = sbr.rel (%p133) target = $region20
        $region19: #{tpu_custom_call.1} parent=15 // pred_region
          %s136 = smul.u32 16, %s20
          %p137 = scmp.lt.s32.totalorder %s18, 3
          %s138 = scalar_select %p137, %s18, 3
          %p139 = scmp.lt.s32.totalorder %s136, 15
          %s140 = scalar_select %p139, %s136, 15
          %s141 = smul.addr %s138, 16
          %s142 = sadd.s32 %s140, %s141
          %s143 = smul.addr %s142, 8
          %s144 = scalar_lea.vmem %s0, %s143
          %s145 = smul.u32 16, %s20
        $region20: #{tpu_custom_call.1} parent=15 // pred_fallthru
          _
        // Predicated region
        $region21: #{tpu_custom_call.1} parent=15 // pred_check
          %p146 = pneg %p80
        $region22: #{tpu_custom_call.1} parent=15 // pred_check_branch
          %148 = sbr.rel (%p146) target = $region24
        $region23: #{tpu_custom_call.1} parent=15 // pred_region
          %p149 = scmp.lt.s32.totalorder %s18, 3
          %s150 = scalar_select %p149, %s18, 3
          %p151 = scmp.lt.s32.totalorder %s20, 0
          %s152 = scalar_select %p151, %s20, 0
          %s153 = sadd.s32 %s152, %s150
          %s154 = smul.addr %s153, 4
          %s155 = scalar_lea.vmem %s1, %s154
        $region24: #{tpu_custom_call.1} parent=15 // pred_fallthru
          _
      $region16: #{tpu_custom_call.1} parent=5 // pred_fallthru
        _
      %p156 = scmp.le.s32.totalorder 1, %s11
      %p157 = scmp.lt.s32.totalorder %s11, 5
      %p158 = pnand %p156, %p157
      %p159 = pneg %p158
      // Predicated region
      $region25: #{tpu_custom_call.1} parent=5 // pred_check
        _
      $region26: #{tpu_custom_call.1} parent=5 // pred_check_branch
        %161 = sbr.rel (%p158) target = $region28
      $region27: #{tpu_custom_call.1} parent=5 // pred_region
        %s162 = ssub.s32 %s11, 1
        %s163 = smul.u32 16, %s23
        %p164 = scmp.lt.s32.totalorder %s21, 3
        %s165 = scalar_select %p164, %s21, 3
        %p166 = scmp.lt.s32.totalorder %s163, 15
        %s167 = scalar_select %p166, %s163, 15
        %s168 = smul.addr %s165, 16
        %s169 = sadd.s32 %s167, %s168
        %s170 = smul.addr %s169, 8
        %s171 = scalar_lea.vmem %s0, %s170
        %p172 = pneg %p58
        %p173 = pneg %p55
        %p174 = scmp.lt.s32.totalorder %s21, 3
        %s175 = scalar_select %p174, %s21, 3
        %p176 = scmp.lt.s32.totalorder %s23, 0
        %s177 = scalar_select %p176, %s23, 0
        %s178 = sadd.s32 %s177, %s175
        %s179 = smul.addr %s178, 4
        %s180 = scalar_lea.vmem %s1, %s179
        %p181 = pneg %p86
        %p182 = pneg %p83
        %p183 = pneg %p114
        %p184 = pneg %p111
        %s185 = sand.u32 %s101, 1
        %s186 = scalar_lea.sflag [#allocation3], %s185
        %s187 = sand.u32 %s101, 1
        %s188 = smul.addr %s187, 8
        %s189 = scalar_lea.vmem [#allocation2], %s188
        %s190 = smul.u32 16, %s23
        %p191 = scmp.lt.s32.totalorder %s21, 3
        %s192 = scalar_select %p191, %s21, 3
        %p193 = scmp.lt.s32.totalorder %s190, 15
        %s194 = scalar_select %p193, %s190, 15
        %s195 = smul.addr %s192, 16
        %s196 = sadd.s32 %s194, %s195
        %s197 = smul.addr %s196, 8
        %s198 = scalar_lea.vmem %s0, %s197
        %s199 = smul.u32 16, %s23
        %p200 = scmp.lt.s32.totalorder %s21, 3
        %s201 = scalar_select %p200, %s21, 3
        %p202 = scmp.lt.s32.totalorder %s23, 0
        %s203 = scalar_select %p202, %s23, 0
        %s204 = sadd.s32 %s203, %s201
        %s205 = smul.addr %s204, 4
        %s206 = scalar_lea.vmem %s1, %s205
        %s207 = smul.u32 2, %s22
        %p208 = scmp.eq.s32.totalorder %s23, 0
        // Predicated region
        $region29: #{tpu_custom_call.1} parent=27 // pred_check
          %p209 = pneg %p208
        $region30: #{tpu_custom_call.1} parent=27 // pred_check_branch
          %211 = sbr.rel (%p209) target = $region32
        $region31: #{tpu_custom_call.1} parent=27 // pred_region
          %212 = vst [vmem:[%s189] sm:$0xff] 0.0
        $region32: #{tpu_custom_call.1} parent=27 // pred_fallthru
          _
        %v213 = vld [vmem:[%s198] sm:$0xff]
        %v214 = vld [vmem:[%s198 + $0x8] sm:$0xff]
        %v215 = vld [vmem:[%s198 + $0x10] sm:$0xff]
        %v216 = vld [vmem:[%s198 + $0x18] sm:$0xff]
        %v217 = vld [vmem:[%s198 + $0x20] sm:$0xff]
        %v218 = vld [vmem:[%s198 + $0x28] sm:$0xff]
        %v219 = vld [vmem:[%s198 + $0x30] sm:$0xff]
        %v220 = vld [vmem:[%s198 + $0x38] sm:$0xff]
        %v221 = vld [vmem:[%s198 + $0x40] sm:$0xff]
        %v222 = vld [vmem:[%s198 + $0x48] sm:$0xff]
        %v223 = vld [vmem:[%s198 + $0x50] sm:$0xff]
        %v224 = vld [vmem:[%s198 + $0x58] sm:$0xff]
        %v225 = vld [vmem:[%s198 + $0x60] sm:$0xff]
        %v226 = vld [vmem:[%s198 + $0x68] sm:$0xff]
        %v227 = vld [vmem:[%s198 + $0x70] sm:$0xff]
        %v228 = vld [vmem:[%s198 + $0x78] sm:$0xff]
        %v229 = vlaneseq
        %v230 = vand.u32 %v229, 127
        %v231 = vadd.s32 %v230, 128
        %s232 = smul.u32 %s22, 256
        %v233 = vstv %s232
        %v234 = vadd.s32 %v230, %v233
        %v235 = vadd.s32 %v231, %v233
        %236 = vset.pattern.permute.xlu0 0
        %237 = vperm.xlu0 %236, %v213
        %v238 = vpop.permute.xlu0 %237
        %239 = vset.pattern.permute.xlu0 0
        %240 = vperm.xlu0 %239, %v214
        %v241 = vpop.permute.xlu0 %240
        %242 = vset.pattern.permute.xlu0 0
        %243 = vperm.xlu0 %242, %v215
        %v244 = vpop.permute.xlu0 %243
        %245 = vset.pattern.permute.xlu0 0
        %246 = vperm.xlu0 %245, %v216
        %v247 = vpop.permute.xlu0 %246
        %248 = vset.pattern.permute.xlu0 0
        %249 = vperm.xlu0 %248, %v217
        %v250 = vpop.permute.xlu0 %249
        %251 = vset.pattern.permute.xlu0 0
        %252 = vperm.xlu0 %251, %v218
        %v253 = vpop.permute.xlu0 %252
        %254 = vset.pattern.permute.xlu0 0
        %255 = vperm.xlu0 %254, %v219
        %v256 = vpop.permute.xlu0 %255
        %257 = vset.pattern.permute.xlu0 0
        %258 = vperm.xlu0 %257, %v220
        %v259 = vpop.permute.xlu0 %258
        %260 = vset.pattern.permute.xlu0 0
        %261 = vperm.xlu0 %260, %v221
        %v262 = vpop.permute.xlu0 %261
        %263 = vset.pattern.permute.xlu0 0
        %264 = vperm.xlu0 %263, %v222
        %v265 = vpop.permute.xlu0 %264
        %266 = vset.pattern.permute.xlu0 0
        %267 = vperm.xlu0 %266, %v223
        %v268 = vpop.permute.xlu0 %267
        %269 = vset.pattern.permute.xlu0 0
        %270 = vperm.xlu0 %269, %v224
        %v271 = vpop.permute.xlu0 %270
        %272 = vset.pattern.permute.xlu0 0
        %273 = vperm.xlu0 %272, %v225
        %v274 = vpop.permute.xlu0 %273
        %275 = vset.pattern.permute.xlu0 0
        %276 = vperm.xlu0 %275, %v226
        %v277 = vpop.permute.xlu0 %276
        %278 = vset.pattern.permute.xlu0 0
        %279 = vperm.xlu0 %278, %v227
        %v280 = vpop.permute.xlu0 %279
        %281 = vset.pattern.permute.xlu0 0
        %282 = vperm.xlu0 %281, %v228
        %v283 = vpop.permute.xlu0 %282
        %vm284 = vcmp.eq.s32.totalorder %v238, %v234
        %vm285 = vcmp.eq.s32.totalorder %v238, %v235
        %vm286 = vcmp.eq.s32.totalorder %v241, %v234
        %vm287 = vcmp.eq.s32.totalorder %v241, %v235
        %vm288 = vcmp.eq.s32.totalorder %v244, %v234
        %vm289 = vcmp.eq.s32.totalorder %v244, %v235
        %vm290 = vcmp.eq.s32.totalorder %v247, %v234
        %vm291 = vcmp.eq.s32.totalorder %v247, %v235
        %vm292 = vcmp.eq.s32.totalorder %v250, %v234
        %vm293 = vcmp.eq.s32.totalorder %v250, %v235
        %vm294 = vcmp.eq.s32.totalorder %v253, %v234
        %vm295 = vcmp.eq.s32.totalorder %v253, %v235
        %vm296 = vcmp.eq.s32.totalorder %v256, %v234
        %vm297 = vcmp.eq.s32.totalorder %v256, %v235
        %vm298 = vcmp.eq.s32.totalorder %v259, %v234
        %vm299 = vcmp.eq.s32.totalorder %v259, %v235
        %vm300 = vcmp.eq.s32.totalorder %v262, %v234
        %vm301 = vcmp.eq.s32.totalorder %v262, %v235
        %vm302 = vcmp.eq.s32.totalorder %v265, %v234
        %vm303 = vcmp.eq.s32.totalorder %v265, %v235
        %vm304 = vcmp.eq.s32.totalorder %v268, %v234
        %vm305 = vcmp.eq.s32.totalorder %v268, %v235
        %vm306 = vcmp.eq.s32.totalorder %v271, %v234
        %vm307 = vcmp.eq.s32.totalorder %v271, %v235
        %vm308 = vcmp.eq.s32.totalorder %v274, %v234
        %vm309 = vcmp.eq.s32.totalorder %v274, %v235
        %vm310 = vcmp.eq.s32.totalorder %v277, %v234
        %vm311 = vcmp.eq.s32.totalorder %v277, %v235
        %vm312 = vcmp.eq.s32.totalorder %v280, %v234
        %vm313 = vcmp.eq.s32.totalorder %v280, %v235
        %vm314 = vcmp.eq.s32.totalorder %v283, %v234
        %vm315 = vcmp.eq.s32.totalorder %v283, %v235
        %v316 = vsel %vm284, 1, 0
        %v317 = vsel %vm285, 1, 0
        %v318 = vsel %vm286, 1, 0
        %v319 = vsel %vm287, 1, 0
        %v320 = vsel %vm288, 1, 0
        %v321 = vsel %vm289, 1, 0
        %v322 = vsel %vm290, 1, 0
        %v323 = vsel %vm291, 1, 0
        %v324 = vsel %vm292, 1, 0
        %v325 = vsel %vm293, 1, 0
        %v326 = vsel %vm294, 1, 0
        %v327 = vsel %vm295, 1, 0
        %v328 = vsel %vm296, 1, 0
        %v329 = vsel %vm297, 1, 0
        %v330 = vsel %vm298, 1, 0
        %v331 = vsel %vm299, 1, 0
        %v332 = vsel %vm300, 1, 0
        %v333 = vsel %vm301, 1, 0
        %v334 = vsel %vm302, 1, 0
        %v335 = vsel %vm303, 1, 0
        %v336 = vsel %vm304, 1, 0
        %v337 = vsel %vm305, 1, 0
        %v338 = vsel %vm306, 1, 0
        %v339 = vsel %vm307, 1, 0
        %v340 = vsel %vm308, 1, 0
        %v341 = vsel %vm309, 1, 0
        %v342 = vsel %vm310, 1, 0
        %v343 = vsel %vm311, 1, 0
        %v344 = vsel %vm312, 1, 0
        %v345 = vsel %vm313, 1, 0
        %v346 = vsel %vm314, 1, 0
        %v347 = vsel %vm315, 1, 0
        %v348 = vcvt.s32.f32 %v316
        %v349 = vcvt.s32.f32 %v317
        %v350 = vcvt.s32.f32 %v318
        %v351 = vcvt.s32.f32 %v319
        %v352 = vcvt.s32.f32 %v320
        %v353 = vcvt.s32.f32 %v321
        %v354 = vcvt.s32.f32 %v322
        %v355 = vcvt.s32.f32 %v323
        %v356 = vcvt.s32.f32 %v324
        %v357 = vcvt.s32.f32 %v325
        %v358 = vcvt.s32.f32 %v326
        %v359 = vcvt.s32.f32 %v327
        %v360 = vcvt.s32.f32 %v328
        %v361 = vcvt.s32.f32 %v329
        %v362 = vcvt.s32.f32 %v330
        %v363 = vcvt.s32.f32 %v331
        %v364 = vcvt.s32.f32 %v332
        %v365 = vcvt.s32.f32 %v333
        %v366 = vcvt.s32.f32 %v334
        %v367 = vcvt.s32.f32 %v335
        %v368 = vcvt.s32.f32 %v336
        %v369 = vcvt.s32.f32 %v337
        %v370 = vcvt.s32.f32 %v338
        %v371 = vcvt.s32.f32 %v339
        %v372 = vcvt.s32.f32 %v340
        %v373 = vcvt.s32.f32 %v341
        %v374 = vcvt.s32.f32 %v342
        %v375 = vcvt.s32.f32 %v343
        %v376 = vcvt.s32.f32 %v344
        %v377 = vcvt.s32.f32 %v345
        %v378 = vcvt.s32.f32 %v346
        %v379 = vcvt.s32.f32 %v347
        %v380 = vld [vmem:[%s206] sm:$0xf]
        %v381 = vld [vmem:[%s189] sm:$0xff]
        %382 = vmatpush.msra.mxu0 %v378
        %383 = vmatpush.msra.mxu0 %v376
        %384 = vmatpush.msra.mxu0 %v374
        %385 = vmatpush.msra.mxu0 %v372
        %386 = vmatpush.msra.mxu0 %v370
        %387 = vmatpush.msra.mxu0 %v368
        %388 = vmatpush.msra.mxu0 %v366
        %389 = vmatpush.msra.mxu0 %v364
        %390 = vmatpush.msra.mxu0 %v362
        %391 = vmatpush.msra.mxu0 %v360
        %392 = vmatpush.msra.mxu0 %v358
        %393 = vmatpush.msra.mxu0 %v356
        %394 = vmatpush.msra.mxu0 %v354
        %395 = vmatpush.msra.mxu0 %v352
        %396 = vmatpush.msra.mxu0 %v350
        %397 = vmatpush.msra.mxu0 %v348
        %398 = vmatmul.f32.gmra.mxu0 %v380
        %v399 = vpop.f32.mrf.mxu0
        %v400 = vadd.f32 0.0, %v399
        %401 = vdwg.mxu0
        %402 = vmatpush.msra.mxu0 %v379
        %403 = vmatpush.msra.mxu0 %v377
        %404 = vmatpush.msra.mxu0 %v375
        %405 = vmatpush.msra.mxu0 %v373
        %406 = vmatpush.msra.mxu0 %v371
        %407 = vmatpush.msra.mxu0 %v369
        %408 = vmatpush.msra.mxu0 %v367
        %409 = vmatpush.msra.mxu0 %v365
        %410 = vmatpush.msra.mxu0 %v363
        %411 = vmatpush.msra.mxu0 %v361
        %412 = vmatpush.msra.mxu0 %v359
        %413 = vmatpush.msra.mxu0 %v357
        %414 = vmatpush.msra.mxu0 %v355
        %415 = vmatpush.msra.mxu0 %v353
        %416 = vmatpush.msra.mxu0 %v351
        %417 = vmatpush.msra.mxu0 %v349
        %418 = vmatmul.f32.gmra.mxu0 %v380
        %v419 = vpop.f32.mrf.mxu0
        %v420 = vadd.f32 0.0, %v419
        %421 = vdwg.mxu0
        %v424 = vrot.slane %v420, 4
        %vm425 = vcmask 1043456
        %v426 = vsel %vm425, %v400, %v424
        %v428 = vadd.f32 %v381, %v426
        %429 = vst [vmem:[%s189] sm:$0xff] %v428
        %s430 = sand.u32 %s101, 1
        %s431 = scalar_lea.sflag [#allocation3], %s430
        %s432 = sand.u32 %s101, 1
        %s433 = smul.addr %s432, 8
        %s434 = scalar_lea.vmem [#allocation2], %s433
        // Predicated region
        $region33: #{tpu_custom_call.1} parent=27 // pred_check
          %p435 = pneg %p111
        $region34: #{tpu_custom_call.1} parent=27 // pred_check_branch
          %437 = sbr.rel (%p435) target = $region36
        $region35: #{tpu_custom_call.1} parent=27 // pred_region
          %s438 = smul.u32 2, %s22
          %440 = vsyncadd %s431, 0
          %s441 = smul.addr %s21, 2
          %s442 = sadd.s32 %s438, %s441
          %s443 = smul.addr %s442, 4
          %s444 = scalar_lea.hbm %s2, %s443
          %s446 = sshll.u32 %s434, 4
          %s447 = int_to_ptr.vmem [resolvable:$true] %s446
          %s448 = sshll.u32 %s444, 4
          %s449 = int_to_ptr.hbm [resolvable:$true] %s448
          %451 = dma.vmem_to_hbm [thread:$0]  %s447, 128, %s449, %s431
        $region36: #{tpu_custom_call.1} parent=27 // pred_fallthru
          _
      $region28: #{tpu_custom_call.1} parent=5 // pred_fallthru
        _
      %p452 = scmp.le.s32.totalorder 2, %s11
      // Predicated region
      $region37: #{tpu_custom_call.1} parent=5 // pred_check
        %p453 = pneg %p452
      $region38: #{tpu_custom_call.1} parent=5 // pred_check_branch
        %455 = sbr.rel (%p453) target = $region40
      $region39: #{tpu_custom_call.1} parent=5 // pred_region
        %s456 = ssub.s32 %s11, 2
        // Predicated region
        $region41: #{tpu_custom_call.1} parent=39 // pred_check
          %p457 = pneg %p117
        $region42: #{tpu_custom_call.1} parent=39 // pred_check_branch
          %459 = sbr.rel (%p457) target = $region44
        $region43: #{tpu_custom_call.1} parent=39 // pred_region
          %s460 = sand.u32 %s102, 1
          %s461 = scalar_lea.sflag [#allocation3], %s460
          %s462 = sand.u32 %s102, 1
          %s463 = smul.addr %s462, 8
          %s464 = scalar_lea.vmem [#allocation2], %s463
          %466 = dma.done %s461, 128
        $region44: #{tpu_custom_call.1} parent=39 // pred_fallthru
          _
      $region40: #{tpu_custom_call.1} parent=5 // pred_fallthru
        _
    $region6: #{tpu_custom_call.1} parent=1 // loop_footer
      %s15 = sadd.s32 1, %s11
    $region7: #{tpu_custom_call.1} parent=1 // loop_footer_branch
      %10 = sbr.rel target = $region3
    $region8: #{tpu_custom_call.1} parent=1 // loop_exit
      _
    %467 = vsyncpa [#allocation3], 1
    %s468 = scalar_lea.sflag [#allocation3], 1
    %469 = vsyncpa %s468, 1

</llo_original>
